<compile_context>
chip_gen: v5e
topology: v5e:2x2
jax: 0.10.0
libtpu: 0.0.40
codegen_flags: <defaults>
</compile_context>

<pallas_src>
import jax
import jax.numpy as jnp
from jax.experimental import pallas as pl
from jax.experimental.pallas import tpu as pltpu


def _masked_loss_kernel(out_ref, props_ref, mask_ref, num_ref, den_ref):
    """Grid = (num_cores, num_batch_steps).

    out_ref / props_ref / mask_ref : (P, TB) lane-dense tiles (batch on lanes)
    num_ref / den_ref              : (1, P, 1) f32 per-core resident accumulators
    """
    step = pl.program_id(1)

    @pl.when(step == 0)
    def _():
        num_ref[...] = jnp.zeros_like(num_ref)
        den_ref[...] = jnp.zeros_like(den_ref)

    o = out_ref[...].astype(jnp.float32)
    p = props_ref[...].astype(jnp.float32)
    m = mask_ref[...].astype(jnp.float32)

    d = (o - p) * m  # masked residual; squaring d matches torch for any mask
    num_ref[0] += jnp.sum(d * d, axis=1, keepdims=True)  # (P, 1)
    den_ref[0] += jnp.sum(m, axis=1, keepdims=True)      # (P, 1)


def masked_loss(outputs, props, loss_mask, properties, *,
                batch_tile=1024, num_cores=2):
    """Returns {property_name: scalar loss}, matching the PyTorch module."""
    if loss_mask.dtype == jnp.bool_:
        loss_mask = loss_mask.astype(outputs.dtype)

    B, P = outputs.shape
    assert props.shape == (B, P) and loss_mask.shape == (B, P)

    # Lane-dense layout: put the batch axis on the 128-lane dimension.
    o_t = jnp.transpose(outputs)    # (P, B)
    p_t = jnp.transpose(props)
    m_t = jnp.transpose(loss_mask)

    if B <= batch_tile:
        ncores, tb = 1, B           # single full-extent block (no (8,128) constraint)
    else:
        ncores, tb = num_cores, batch_tile  # batch_tile is a multiple of 128

    chunk = ncores * tb
    b_pad = pl.cdiv(B, chunk) * chunk
    if b_pad != B:
        pad = ((0, 0), (0, b_pad - B))
        # Zero-padded mask rows contribute nothing to either numerator or count.
        o_t = jnp.pad(o_t, pad)
        p_t = jnp.pad(p_t, pad)
        m_t = jnp.pad(m_t, pad)
    nsteps = b_pad // chunk

    in_spec = pl.BlockSpec((P, tb), lambda c, i: (0, c * nsteps + i))
    acc_spec = pl.BlockSpec((1, P, 1), lambda c, i: (c, 0, 0))  # resident across i

    num_part, den_part = pl.pallas_call(
        _masked_loss_kernel,
        out_shape=(jax.ShapeDtypeStruct((ncores, P, 1), jnp.float32),
                   jax.ShapeDtypeStruct((ncores, P, 1), jnp.float32)),
        grid_spec=pltpu.PrefetchScalarGridSpec(
            num_scalar_prefetch=0,
            grid=(ncores, nsteps),
            in_specs=[in_spec, in_spec, in_spec],
            out_specs=(acc_spec, acc_spec),
        ),
        compiler_params=pltpu.CompilerParams(
            dimension_semantics=("parallel", "arbitrary"),
            vmem_limit_bytes=32 * 1024 * 1024,
        ),
    )(o_t, p_t, m_t)

    # Tiny epilogue: combine per-core partials, apply the den==0 guard, divide.
    num = jnp.sum(num_part[:, :, 0], axis=0)   # (P,)
    den = jnp.sum(den_part[:, :, 0], axis=0)   # (P,)
    per_prop = num / jnp.where(den == 0.0, 1.0, den)
    return {prop: per_prop[i] for i, prop in enumerate(properties)}


def masked_loss_ref(outputs, props, loss_mask, properties):
    """Pure-JAX reference mirroring the PyTorch loop."""
    outputs = outputs.astype(jnp.float32)
    props = props.astype(jnp.float32)
    loss_mask = loss_mask.astype(jnp.float32)
    loss = {}
    for i, prop in enumerate(properties):
        d = (outputs[:, i] - props[:, i]) * loss_mask[:, i]
        num = jnp.sum(d ** 2.0)
        den = jnp.sum(loss_mask[:, i])
        loss[prop] = num / jnp.where(den == 0.0, 1.0, den)
    return loss


def _check(loss, ref, properties, rtol, atol):
    for prop in properties:
        assert jnp.allclose(loss[prop], ref[prop], rtol=rtol, atol=atol), (
            prop, loss[prop], ref[prop])


if __name__ == "__main__":
    key = jax.random.PRNGKey(0)

    # ---- Test 1: small f32 case (single block path), with an all-zero mask column
    k1, k2, k3, k4, k5, k6 = jax.random.split(key, 6)
    B, P = 8, 4
    properties = ["prop_a", "prop_b", "prop_c", "prop_d"]

    outputs = jax.random.normal(k1, (B, P), dtype=jnp.float32)
    props = jax.random.normal(k2, (B, P), dtype=jnp.float32)
    loss_mask = (jax.random.uniform(k3, (B, P)) > 0.4).astype(jnp.float32)
    loss_mask = loss_mask.at[:, 2].set(0.0)   # exercise the sum(mask)==0 branch

    loss = masked_loss(outputs, props, loss_mask, properties)
    loss = jax.tree_util.tree_map(jax.block_until_ready, loss)
    _check(loss, masked_loss_ref(outputs, props, loss_mask, properties),
           properties, rtol=1e-6, atol=1e-6)

    # ---- Test 2: bf16 inputs, tiled grid path with padding + 2-way parallel axis
    B2 = 384
    outputs2 = jax.random.normal(k4, (B2, P), dtype=jnp.bfloat16)
    props2 = jax.random.normal(k5, (B2, P), dtype=jnp.bfloat16)
    loss_mask2 = (jax.random.uniform(k6, (B2, P)) > 0.3).astype(jnp.bfloat16)

    loss2 = masked_loss(outputs2, props2, loss_mask2, properties,
                        batch_tile=128, num_cores=2)
    loss2 = jax.tree_util.tree_map(jax.block_until_ready, loss2)
    _check(loss2, masked_loss_ref(outputs2, props2, loss_mask2, properties),
           properties, rtol=1e-4, atol=1e-5)

    print("KERNEL_OK")
</pallas_src>

<mosaic_0001>
module attributes {stable_mosaic.version = 11 : i64} {
  func.func @_masked_loss_kernel(%arg0: i32, %arg1: i32, %arg2: memref<4x8xf32, #tpu.memory_space<vmem>>, %arg3: memref<4x8xf32, #tpu.memory_space<vmem>>, %arg4: memref<4x8xf32, #tpu.memory_space<vmem>>, %arg5: memref<1x4x1xf32, #tpu.memory_space<vmem>>, %arg6: memref<1x4x1xf32, #tpu.memory_space<vmem>>) attributes {dimension_semantics = [#tpu.dimension_semantics<parallel>, #tpu.dimension_semantics<arbitrary>], iteration_bounds = array<i64: 1, 1>, scalar_prefetch = 0 : i64, scratch_operands = 0 : i64, tpu.core_type = #tpu.core_type<tc>, window_params = [{transform_indices = @transform_0, window_bounds = array<i64: 4, 8>}, {transform_indices = @transform_1, window_bounds = array<i64: 4, 8>}, {transform_indices = @transform_2, window_bounds = array<i64: 4, 8>}, {transform_indices = @transform_3, window_bounds = array<i64: 1, 4, 1>}, {transform_indices = @transform_4, window_bounds = array<i64: 1, 4, 1>}]} {
    %c0_i32 = arith.constant 0 : i32
    %0 = arith.cmpi eq, %arg1, %c0_i32 : i32
    %1 = arith.extui %0 : i1 to i32
    %c0_i32_0 = arith.constant 0 : i32
    %2 = arith.cmpi ne, %1, %c0_i32_0 : i32
    scf.if %2 {
      %cst_19 = arith.constant 0.000000e+00 : f32
      %25 = vector.broadcast %cst_19 : f32 to vector<1x4x1xf32>
      %c0_20 = arith.constant 0 : index
      %c0_21 = arith.constant 0 : index
      %c0_22 = arith.constant 0 : index
      %26 = vector.load %arg5[%c0_20, %c0_21, %c0_22] : memref<1x4x1xf32, #tpu.memory_space<vmem>>, vector<1x4x1xf32>
      tpu.vector_store %arg5[%c0_20, %c0_21, %c0_22], %25 {strides = array<i32>} : memref<1x4x1xf32, #tpu.memory_space<vmem>>, vector<1x4x1xf32>,
      %cst_23 = arith.constant 0.000000e+00 : f32
      %27 = vector.broadcast %cst_23 : f32 to vector<1x4x1xf32>
      %c0_24 = arith.constant 0 : index
      %c0_25 = arith.constant 0 : index
      %c0_26 = arith.constant 0 : index
      %28 = vector.load %arg6[%c0_24, %c0_25, %c0_26] : memref<1x4x1xf32, #tpu.memory_space<vmem>>, vector<1x4x1xf32>
      tpu.vector_store %arg6[%c0_24, %c0_25, %c0_26], %27 {strides = array<i32>} : memref<1x4x1xf32, #tpu.memory_space<vmem>>, vector<1x4x1xf32>,
    } else {
    }
    %c0 = arith.constant 0 : index
    %c0_1 = arith.constant 0 : index
    %3 = vector.load %arg2[%c0, %c0_1] : memref<4x8xf32, #tpu.memory_space<vmem>>, vector<4x8xf32>
    %c0_2 = arith.constant 0 : index
    %c0_3 = arith.constant 0 : index
    %4 = vector.load %arg3[%c0_2, %c0_3] : memref<4x8xf32, #tpu.memory_space<vmem>>, vector<4x8xf32>
    %c0_4 = arith.constant 0 : index
    %c0_5 = arith.constant 0 : index
    %5 = vector.load %arg4[%c0_4, %c0_5] : memref<4x8xf32, #tpu.memory_space<vmem>>, vector<4x8xf32>
    %6 = arith.subf %3, %4 : vector<4x8xf32>
    %7 = arith.mulf %6, %5 : vector<4x8xf32>
    %c0_6 = arith.constant 0 : index
    %c0_7 = arith.constant 0 : index
    %c0_8 = arith.constant 0 : index
    %8 = vector.load %arg5[%c0_6, %c0_7, %c0_8] : memref<1x4x1xf32, #tpu.memory_space<vmem>>, vector<1x4x1xf32>
    %9 = vector.shape_cast %8 : vector<1x4x1xf32> to vector<4x1xf32>
    %10 = arith.mulf %7, %7 : vector<4x8xf32>
    %cst = arith.constant dense<0.000000e+00> : vector<4xf32>
    %11 = vector.multi_reduction <add>, %10, %cst [1] : vector<4x8xf32> to vector<4xf32>
    %12 = vector.shape_cast %11 : vector<4xf32> to vector<4x1xf32>
    %13 = arith.addf %9, %12 : vector<4x1xf32>
    %c0_9 = arith.constant 0 : index
    %c0_10 = arith.constant 0 : index
    %c0_11 = arith.constant 0 : index
    %14 = vector.load %arg5[%c0_9, %c0_10, %c0_11] : memref<1x4x1xf32, #tpu.memory_space<vmem>>, vector<1x4x1xf32>
    %15 = vector.shape_cast %14 : vector<1x4x1xf32> to vector<4x1xf32>
    %16 = vector.shape_cast %13 : vector<4x1xf32> to vector<1x4x1xf32>
    tpu.vector_store %arg5[%c0_9, %c0_10, %c0_11], %16 {strides = array<i32>} : memref<1x4x1xf32, #tpu.memory_space<vmem>>, vector<1x4x1xf32>,
    %c0_12 = arith.constant 0 : index
    %c0_13 = arith.constant 0 : index
    %c0_14 = arith.constant 0 : index
    %17 = vector.load %arg6[%c0_12, %c0_13, %c0_14] : memref<1x4x1xf32, #tpu.memory_space<vmem>>, vector<1x4x1xf32>
    %18 = vector.shape_cast %17 : vector<1x4x1xf32> to vector<4x1xf32>
    %cst_15 = arith.constant dense<0.000000e+00> : vector<4xf32>
    %19 = vector.multi_reduction <add>, %5, %cst_15 [1] : vector<4x8xf32> to vector<4xf32>
    %20 = vector.shape_cast %19 : vector<4xf32> to vector<4x1xf32>
    %21 = arith.addf %18, %20 : vector<4x1xf32>
    %c0_16 = arith.constant 0 : index
    %c0_17 = arith.constant 0 : index
    %c0_18 = arith.constant 0 : index
    %22 = vector.load %arg6[%c0_16, %c0_17, %c0_18] : memref<1x4x1xf32, #tpu.memory_space<vmem>>, vector<1x4x1xf32>
    %23 = vector.shape_cast %22 : vector<1x4x1xf32> to vector<4x1xf32>
    %24 = vector.shape_cast %21 : vector<4x1xf32> to vector<1x4x1xf32>
    tpu.vector_store %arg6[%c0_16, %c0_17, %c0_18], %24 {strides = array<i32>} : memref<1x4x1xf32, #tpu.memory_space<vmem>>, vector<1x4x1xf32>,
    return
  }
  func.func @transform_0(%arg0: i32, %arg1: i32) -> (i32, i32) {
    %c1_i32 = arith.constant 1 : i32
    %0 = arith.muli %arg0, %c1_i32 : i32
    %1 = arith.addi %0, %arg1 : i32
    %c0_i32 = arith.constant 0 : i32
    %c0_i32_0 = arith.constant 0 : i32
    return %c0_i32, %1 : i32, i32
  }
  func.func @transform_1(%arg0: i32, %arg1: i32) -> (i32, i32) {
    %c1_i32 = arith.constant 1 : i32
    %0 = arith.muli %arg0, %c1_i32 : i32
    %1 = arith.addi %0, %arg1 : i32
    %c0_i32 = arith.constant 0 : i32
    %c0_i32_0 = arith.constant 0 : i32
    return %c0_i32, %1 : i32, i32
  }
  func.func @transform_2(%arg0: i32, %arg1: i32) -> (i32, i32) {
    %c1_i32 = arith.constant 1 : i32
    %0 = arith.muli %arg0, %c1_i32 : i32
    %1 = arith.addi %0, %arg1 : i32
    %c0_i32 = arith.constant 0 : i32
    %c0_i32_0 = arith.constant 0 : i32
    return %c0_i32, %1 : i32, i32
  }
  func.func @transform_3(%arg0: i32, %arg1: i32) -> (i32, i32, i32) {
    %c0_i32 = arith.constant 0 : i32
    %c0_i32_0 = arith.constant 0 : i32
    %c0_i32_1 = arith.constant 0 : i32
    return %arg0, %c0_i32, %c0_i32_0 : i32, i32, i32
  }
  func.func @transform_4(%arg0: i32, %arg1: i32) -> (i32, i32, i32) {
    %c0_i32 = arith.constant 0 : i32
    %c0_i32_0 = arith.constant 0 : i32
    %c0_i32_1 = arith.constant 0 : i32
    return %arg0, %c0_i32, %c0_i32_0 : i32, i32, i32
  }
}

</mosaic_0001>

<llo_original>
// kernel: tpu_custom_call.1
$region0: #{tpu_custom_call.1}
  #allocation0 [shape = 'u32[]', space=smem, size = 0x4, offset = 0x4, fixed_abs, tag = 'smem constant byte address 0x4 - core index']
  #allocation1 [shape = 'u32[72,128]{1,0:T(1,128)}', space=vmem, size = 0x9000, scoped, tag = 'internal scratch']
  %s0 = inlined_call_operand.hbm [shape: f32[4,8], index: 0, kind: input, shape index: {}]
  %s1 = inlined_call_operand.hbm [shape: f32[4,8], index: 1, kind: input, shape index: {}]
  %s2 = inlined_call_operand.hbm [shape: f32[4,8], index: 2, kind: input, shape index: {}]
  %s3 = inlined_call_operand.vmem [shape: f32[1,4,1], index: 3, kind: output, shape index: {0}]
  %s4 = inlined_call_operand.vmem [shape: f32[1,4,1], index: 4, kind: output, shape index: {1}]
  %5 = xla_tuple %s3, %s4
  %s6 = sld [smem:[#allocation0]]
  $region46: #{tpu_custom_call.1} parent=0
    _
  %s8 = ssub.s32 1, %s6
  %s9 = scalar_select 0, %s8, %s6
  $region1: #{tpu_custom_call.1} parent=0
    #allocation2 [shape = 'u8[2048]{0}', space=vmem, size = 0x800, scoped, tag = 'input window, operand 0, single buffered']
    #allocation3 [shape = 's32[1]{0}', space=sflag, size = 0x4, scoped, tag = 'scoped memory for tpu_custom_call.1']
    #allocation4 [shape = 'u8[2048]{0}', space=vmem, size = 0x800, scoped, tag = 'input window, operand 1, single buffered']
    #allocation5 [shape = 's32[1]{0}', space=sflag, size = 0x4, scoped, tag = 'scoped memory for tpu_custom_call.1']
    #allocation6 [shape = 'u8[2048]{0}', space=vmem, size = 0x800, scoped, tag = 'input window, operand 2, single buffered']
    %10 = vsyncpa [#allocation3], 0
    %11 = vsyncpa [#allocation5], 0
    // Predicated region
    $region2: #{tpu_custom_call.1} parent=1 // pred_check
      _
    $region3: #{tpu_custom_call.1} parent=1 // pred_check_branch
      %13 = sbr.rel (0) target = $region5
    $region4: #{tpu_custom_call.1} parent=1 // pred_region
      %s14 = sadd.s32 0, 0
      %16 = vsyncadd [#allocation3], 0
      %s17 = smul.addr %s14, 4
      %s18 = scalar_lea.hbm %s0, %s17
      %s20 = sshll.u32 %s18, 4
      %s21 = int_to_ptr.hbm [resolvable:$true] %s20
      %s22 = sshll.u32 [#allocation2], 4
      %s23 = int_to_ptr.vmem [resolvable:$true] %s22
      %25 = dma.hbm_to_vmem [thread:$0]  %s21, 64, %s23, [#allocation3]
    $region5: #{tpu_custom_call.1} parent=1 // pred_fallthru
      _
    // Predicated region
    $region6: #{tpu_custom_call.1} parent=1 // pred_check
      _
    $region7: #{tpu_custom_call.1} parent=1 // pred_check_branch
      %27 = sbr.rel (0) target = $region9
    $region8: #{tpu_custom_call.1} parent=1 // pred_region
      %s28 = sadd.s32 0, 0
      %30 = vsyncadd [#allocation5], 0
      %s31 = smul.addr %s28, 4
      %s32 = scalar_lea.hbm %s1, %s31
      %s34 = sshll.u32 %s32, 4
      %s35 = int_to_ptr.hbm [resolvable:$true] %s34
      %s36 = sshll.u32 [#allocation4], 4
      %s37 = int_to_ptr.vmem [resolvable:$true] %s36
      %39 = dma.hbm_to_vmem [thread:$0]  %s35, 64, %s37, [#allocation5]
    $region9: #{tpu_custom_call.1} parent=1 // pred_fallthru
      _
    // Predicated region
    $region10: #{tpu_custom_call.1} parent=1 // pred_check
      _
    $region11: #{tpu_custom_call.1} parent=1 // pred_check_branch
      %41 = sbr.rel (0) target = $region13
    $region12: #{tpu_custom_call.1} parent=1 // pred_region
      %s42 = sadd.s32 0, 0
      %44 = vsyncadd [#allocation5], 0
      %s45 = smul.addr %s42, 4
      %s46 = scalar_lea.hbm %s2, %s45
      %s48 = sshll.u32 %s46, 4
      %s49 = int_to_ptr.hbm [resolvable:$true] %s48
      %s50 = sshll.u32 [#allocation6], 4
      %s51 = int_to_ptr.vmem [resolvable:$true] %s50
      %53 = dma.hbm_to_vmem [thread:$0]  %s49, 64, %s51, [#allocation5]
    $region13: #{tpu_custom_call.1} parent=1 // pred_fallthru
      _
    // Predicated region
    $region14: #{tpu_custom_call.1} parent=1 // pred_check
      _
    $region15: #{tpu_custom_call.1} parent=1 // pred_check_branch
      %55 = sbr.rel (0) target = $region17
    $region16: #{tpu_custom_call.1} parent=1 // pred_region
      %57 = dma.done [#allocation3], 64
    $region17: #{tpu_custom_call.1} parent=1 // pred_fallthru
      _
    // Predicated region
    $region18: #{tpu_custom_call.1} parent=1 // pred_check
      _
    $region19: #{tpu_custom_call.1} parent=1 // pred_check_branch
      %59 = sbr.rel (0) target = $region21
    $region20: #{tpu_custom_call.1} parent=1 // pred_region
      %61 = dma.done [#allocation5], 64
    $region21: #{tpu_custom_call.1} parent=1 // pred_fallthru
      _
    // Predicated region
    $region22: #{tpu_custom_call.1} parent=1 // pred_check
      _
    $region23: #{tpu_custom_call.1} parent=1 // pred_check_branch
      %63 = sbr.rel (0) target = $region25
    $region24: #{tpu_custom_call.1} parent=1 // pred_region
      %65 = dma.done [#allocation5], 64
    $region25: #{tpu_custom_call.1} parent=1 // pred_fallthru
      _
    %s66 = sadd.s32 0, 0
    %s67 = sadd.s32 0, 0
    %s68 = sadd.s32 0, 0
    %p69 = scmp.eq.s32.totalorder 0, 0
    // Predicated region
    $region26: #{tpu_custom_call.1} parent=1 // pred_check
      %p70 = pneg %p69
    $region27: #{tpu_custom_call.1} parent=1 // pred_check_branch
      %72 = sbr.rel (%p70) target = $region29
    $region28: #{tpu_custom_call.1} parent=1 // pred_region
      %vm73 = vcmask 3072
      %74 = vst.msk [vmem:[%s3] sm:$0xf] %vm73, 0.0
      %75 = vst.msk [vmem:[%s4] sm:$0xf] %vm73, 0.0
    $region29: #{tpu_custom_call.1} parent=1 // pred_fallthru
      _
    %v76 = vld [vmem:[#allocation2] sm:$0xf]
    %v77 = vld [vmem:[#allocation4] sm:$0xf]
    %v78 = vld [vmem:[#allocation6] sm:$0xf]
    %v79 = vsub.f32 %v76, %v77
    %v80 = vmul.f32 %v79, %v78
    %v81 = vld [vmem:[%s3] sm:$0xf]
    %v82 = vmul.f32 %v80, %v80
    %vm83 = vcmask 60416
    %v84 = vsel %vm83, %v82, 0.0
    %85 = vadd.xlane.f32.xlu0 %v84
    %v86 = vpop.xlane.xlu0 %85
    %v87 = vadd.f32 %v81, %v86
    %vm88 = vcmask 3072
    %89 = vst.msk [vmem:[%s3] sm:$0xf] %vm88, %v87
    %v90 = vld [vmem:[%s4] sm:$0xf]
    %v91 = vsel %vm83, %v78, 0.0
    %92 = vadd.xlane.f32.xlu0 %v91
    %v93 = vpop.xlane.xlu0 %92
    %v94 = vadd.f32 %v90, %v93
    %95 = vst.msk [vmem:[%s4] sm:$0xf] %vm88, %v94
    // Predicated region
    $region30: #{tpu_custom_call.1} parent=1 // pred_check
      _
    $region31: #{tpu_custom_call.1} parent=1 // pred_check_branch
      %97 = sbr.rel (0) target = $region33
    $region32: #{tpu_custom_call.1} parent=1 // pred_region
      _
    $region33: #{tpu_custom_call.1} parent=1 // pred_fallthru
      _
    // Predicated region
    $region34: #{tpu_custom_call.1} parent=1 // pred_check
      _
    $region35: #{tpu_custom_call.1} parent=1 // pred_check_branch
      %99 = sbr.rel (0) target = $region37
    $region36: #{tpu_custom_call.1} parent=1 // pred_region
      _
    $region37: #{tpu_custom_call.1} parent=1 // pred_fallthru
      _
    // Predicated region
    $region38: #{tpu_custom_call.1} parent=1 // pred_check
      _
    $region39: #{tpu_custom_call.1} parent=1 // pred_check_branch
      %101 = sbr.rel (0) target = $region41
    $region40: #{tpu_custom_call.1} parent=1 // pred_region
      _
    $region41: #{tpu_custom_call.1} parent=1 // pred_fallthru
      _
    // Predicated region
    $region42: #{tpu_custom_call.1} parent=1 // pred_check
      _
    $region43: #{tpu_custom_call.1} parent=1 // pred_check_branch
      %103 = sbr.rel (0) target = $region45
    $region44: #{tpu_custom_call.1} parent=1 // pred_region
      _
    $region45: #{tpu_custom_call.1} parent=1 // pred_fallthru
      _
    %104 = vsyncpa [#allocation3], 1
    %105 = vsyncpa [#allocation5], 1

</llo_original>
